<compile_context>
chip_gen: v6e
topology: v6e:2x2x1
jax: 0.10.0
libtpu: 0.0.40
codegen_flags: <defaults>
</compile_context>

<pallas_src>
import jax
import jax.numpy as jnp
from jax.experimental import pallas as pl
from jax.experimental.pallas import tpu as pltpu

EPS = 1e-10
_LANE = 128


def _l2norm_kernel(x_ref, o_ref):
    x = x_ref[...]                                    # (tm, D) tile in VMEM
    xf = x.astype(jnp.float32)                        # f32 accumulation
    ss = jnp.sum(xf * xf, axis=1, keepdims=True)      # (tm, 1) row sum of squares
    inv = jax.lax.rsqrt(ss + EPS)                     # EUP rsqrt == 1/sqrt(ss+eps)
    o_ref[...] = (xf * inv).astype(o_ref.dtype)       # broadcast multiply along lanes


def _vmem_budget_bytes():
    """Total VMEM footprint budget per TensorCore, generation-aware."""
    try:
        phys = int(pltpu.get_tpu_info().vmem_capacity_bytes)
    except Exception:
        phys = 64 * 1024 * 1024                       # conservative: v7x per-TC
    # v5e/v6e (128 MiB physical) -> 24 MiB total; v7x (64 MiB/TC) -> ~21 MiB.
    return min(24 * 1024 * 1024, phys // 3)


def _sublane_multiple(itemsize):
    # f32 -> 8, bf16 -> 16, int8/fp8 -> 32 (sub-32-bit dtypes pack along sublanes).
    return max(8, 32 // max(1, itemsize))


def _choose_tm(N, D, itemsize):
    """Row tile sized purely from the VMEM byte budget, dtype-aligned."""
    sub = _sublane_multiple(itemsize)
    budget = _vmem_budget_bytes()
    # 2x in + 2x out double buffers (input dtype) + ~2 tile-sized f32 temps.
    bytes_per_row = 4 * D * itemsize + 2 * D * 4
    tm = budget // max(1, bytes_per_row)
    tm = max(sub, (tm // sub) * sub)
    if tm >= N:
        # Whole array fits in one tile.  Keep a single block only for tiny
        # inputs; otherwise split into 2 programs so both v7x TCs get work.
        if N <= 4 * sub or N * D * itemsize <= (1 << 20):
            return N
        tm = pl.cdiv(pl.cdiv(N, 2), sub) * sub
        return min(tm, N)
    # Short grids: prefer an even program count for v7x megacore balance.
    nprog = pl.cdiv(N, tm)
    if 1 < nprog < 16 and nprog % 2 == 1:
        rows = pl.cdiv(N, nprog + 1)
        tm = min(tm, max(sub, pl.cdiv(rows, sub) * sub))
    return tm


def l2norm(x, *, tm=None):
    """x: [N, D] float array. Returns x normalized along dim 1 (PyTorch L2Norm)."""
    N, D = x.shape
    Dp = pl.cdiv(D, _LANE) * _LANE
    xp = x
    if Dp != D:
        # Lane-dense output (multiple of 128) -> unmasked stores; zero padding
        # leaves the per-row sum of squares unchanged.
        xp = jnp.pad(x, ((0, 0), (0, Dp - D)))
    if tm is None:
        tm = _choose_tm(N, Dp, x.dtype.itemsize)
    grid = (pl.cdiv(N, tm),)
    out = pl.pallas_call(
        _l2norm_kernel,
        out_shape=jax.ShapeDtypeStruct((N, Dp), x.dtype),
        grid_spec=pltpu.PrefetchScalarGridSpec(
            num_scalar_prefetch=0,
            grid=grid,
            in_specs=[pl.BlockSpec((tm, Dp), lambda i: (i, 0))],
            out_specs=pl.BlockSpec((tm, Dp), lambda i: (i, 0)),
        ),
        compiler_params=pltpu.CompilerParams(
            dimension_semantics=("parallel",),        # row axis shards across TCs
            vmem_limit_bytes=32 * 1024 * 1024,        # covers the enlarged tiles on v5e too
        ),
    )(xp)
    if Dp != D:
        out = out[:, :D]
    return out


def _ref_l2norm(x):
    # Mirrors the PyTorch forward exactly (computed in f32).
    xf = x.astype(jnp.float32)
    n = jnp.sqrt(jnp.sum(xf * xf, axis=1, keepdims=True) + EPS)
    return (xf / n).astype(x.dtype)


if __name__ == "__main__":
    key = jax.random.PRNGKey(0)

    # Primary test: lane-dense D, auto-chosen tile (single-block path).
    N, D = 16, 128
    x = jax.random.normal(key, (N, D), dtype=jnp.float32)
    out = jax.block_until_ready(l2norm(x))
    ref = _ref_l2norm(x)
    assert out.shape == x.shape and out.dtype == x.dtype
    assert jnp.allclose(out, ref, atol=1e-5, rtol=1e-5)

    # Exercises cdiv grid + masked partial tail block (N % tm != 0).
    k2 = jax.random.PRNGKey(1)
    x2 = jax.random.normal(k2, (100, 128), dtype=jnp.float32)
    out2 = jax.block_until_ready(l2norm(x2, tm=64))
    assert jnp.allclose(out2, _ref_l2norm(x2), atol=1e-5, rtol=1e-5)

    # bf16 input: f32 accumulation + dtype-aware (16-row) sublane alignment.
    k3 = jax.random.PRNGKey(2)
    x3 = jax.random.normal(k3, (64, 256), dtype=jnp.bfloat16)
    out3 = jax.block_until_ready(l2norm(x3))
    assert out3.dtype == jnp.bfloat16
    assert jnp.allclose(out3.astype(jnp.float32),
                        _ref_l2norm(x3).astype(jnp.float32),
                        atol=2e-2, rtol=2e-2)

    # Non-multiple-of-128 feature dim: wrapper pads to lane-dense 128 and slices.
    k4 = jax.random.PRNGKey(3)
    x4 = jax.random.normal(k4, (32, 96), dtype=jnp.float32)
    out4 = jax.block_until_ready(l2norm(x4))
    assert out4.shape == (32, 96)
    assert jnp.allclose(out4, _ref_l2norm(x4), atol=1e-5, rtol=1e-5)

    print("KERNEL_OK")
</pallas_src>

<mosaic_0001>
module attributes {stable_mosaic.version = 11 : i64} {
  func.func @_l2norm_kernel(%arg0: i32, %arg1: memref<16x128xf32, #tpu.memory_space<vmem>>, %arg2: memref<16x128xf32, #tpu.memory_space<vmem>>) attributes {dimension_semantics = [#tpu.dimension_semantics<parallel>], iteration_bounds = array<i64: 1>, scalar_prefetch = 0 : i64, scratch_operands = 0 : i64, tpu.core_type = #tpu.core_type<tc>, window_params = [{transform_indices = @transform_0, window_bounds = array<i64: 16, 128>}, {transform_indices = @transform_1, window_bounds = array<i64: 16, 128>}]} {
    %c0 = arith.constant 0 : index
    %c0_0 = arith.constant 0 : index
    %0 = vector.load %arg1[%c0, %c0_0] : memref<16x128xf32, #tpu.memory_space<vmem>>, vector<16x128xf32>
    %1 = arith.mulf %0, %0 : vector<16x128xf32>
    %cst = arith.constant dense<0.000000e+00> : vector<16xf32>
    %2 = vector.multi_reduction <add>, %1, %cst [1] : vector<16x128xf32> to vector<16xf32>
    %3 = vector.shape_cast %2 : vector<16xf32> to vector<16x1xf32>
    %cst_1 = arith.constant 1.000000e-10 : f32
    %4 = vector.broadcast %cst_1 : f32 to vector<16x1xf32>
    %5 = arith.addf %3, %4 : vector<16x1xf32>
    %6 = math.rsqrt %5 : vector<16x1xf32>
    %7 = vector.broadcast %6 : vector<16x1xf32> to vector<16x128xf32>
    %8 = arith.mulf %0, %7 : vector<16x128xf32>
    %c0_2 = arith.constant 0 : index
    %c0_3 = arith.constant 0 : index
    %9 = vector.load %arg2[%c0_2, %c0_3] : memref<16x128xf32, #tpu.memory_space<vmem>>, vector<16x128xf32>
    tpu.vector_store %arg2[%c0_2, %c0_3], %8 {strides = array<i32>} : memref<16x128xf32, #tpu.memory_space<vmem>>, vector<16x128xf32>,
    return
  }
  func.func @transform_0(%arg0: i32) -> (i32, i32) {
    %c0_i32 = arith.constant 0 : i32
    %c0_i32_0 = arith.constant 0 : i32
    return %arg0, %c0_i32 : i32, i32
  }
  func.func @transform_1(%arg0: i32) -> (i32, i32) {
    %c0_i32 = arith.constant 0 : i32
    %c0_i32_0 = arith.constant 0 : i32
    return %arg0, %c0_i32 : i32, i32
  }
}

</mosaic_0001>

<llo_original>
// kernel: tpu_custom_call.1
$region0: #{tpu_custom_call.1}
  #allocation0 [shape = 'u32[]', space=smem, size = 0x4, offset = 0x4, fixed_abs, tag = 'smem constant byte address 0x4 - core index']
  #allocation1 [shape = 'u32[144,128]{1,0:T(1,128)}', space=vmem, size = 0x12000, scoped, tag = 'internal scratch']
  %s0 = inlined_call_operand.hbm [shape: f32[16,128], index: 0, kind: input, shape index: {}]
  %s1 = inlined_call_operand.hbm [shape: f32[16,128], index: 1, kind: output, shape index: {}]
  %s2 = sld [smem:[#allocation0]]
  $region18: #{tpu_custom_call.1} parent=0
    _
  %s4 = ssub.s32 1, %s2
  %s5 = scalar_select 0, %s4, %s2
  $region1: #{tpu_custom_call.1} parent=0
    #allocation2 [shape = 'u8[8192]{0}', space=vmem, size = 0x2000, scoped, tag = 'input window, operand 0, single buffered']
    #allocation3 [shape = 's32[1]{0}', space=sflag, size = 0x4, scoped, tag = 'scoped memory for tpu_custom_call.1']
    #allocation4 [shape = 's32[1]{0}', space=sflag, size = 0x4, scoped, tag = 'scoped memory for tpu_custom_call.1']
    #allocation5 [shape = 'u8[8192]{0}', space=vmem, size = 0x2000, scoped, tag = 'output window, operand 0, single buffered']
    %6 = vsyncpa [#allocation3], 0
    %7 = vsyncpa [#allocation4], 0
    // Predicated region
    $region2: #{tpu_custom_call.1} parent=1 // pred_check
      _
    $region3: #{tpu_custom_call.1} parent=1 // pred_check_branch
      %9 = sbr.rel (0) target = $region5
    $region4: #{tpu_custom_call.1} parent=1 // pred_region
      %s11 = ssub.s32 256, 256
      %12 = vsyncadd [#allocation3], %s11
      %s13 = sshll.u32 [#allocation2], 4
      %s14 = int_to_ptr.vmem [resolvable:$true] %s13
      %19 = dma.hbm_to_vmem [thread:$0]  %s0, 256, %s14, [#allocation3], 128, 128, 8
    $region5: #{tpu_custom_call.1} parent=1 // pred_fallthru
      _
    // Predicated region
    $region6: #{tpu_custom_call.1} parent=1 // pred_check
      _
    $region7: #{tpu_custom_call.1} parent=1 // pred_check_branch
      %21 = sbr.rel (0) target = $region9
    $region8: #{tpu_custom_call.1} parent=1 // pred_region
      %22 = dma.done [#allocation3], 256
    $region9: #{tpu_custom_call.1} parent=1 // pred_fallthru
      _
    %v23 = vld [vmem:[#allocation2] sm:$0xff]
    %v24 = vld [vmem:[#allocation2 + $0x8] sm:$0xff]
    %v25 = vmul.f32 %v23, %v23
    %v26 = vmul.f32 %v24, %v24
    %27 = vadd.xlane.f32.xlu0 %v25
    %v28 = vpop.xlane.xlu0 %27
    %29 = vadd.xlane.f32.xlu0 %v26
    %v30 = vpop.xlane.xlu0 %29
    %v31 = vadd.f32 %v28, 1e-10
    %v32 = vadd.f32 %v30, 1e-10
    %v33 = vrsqrt.pop %v31
    %v34 = vrsqrt.pop %v32
    %v35 = vmul.f32 %v23, %v33
    %v36 = vmul.f32 %v24, %v34
    %37 = vst [vmem:[#allocation5] sm:$0xff] %v35
    %38 = vst [vmem:[#allocation5 + $0x8] sm:$0xff] %v36
    // Predicated region
    $region10: #{tpu_custom_call.1} parent=1 // pred_check
      _
    $region11: #{tpu_custom_call.1} parent=1 // pred_check_branch
      %40 = sbr.rel (0) target = $region13
    $region12: #{tpu_custom_call.1} parent=1 // pred_region
      %s42 = ssub.s32 256, 256
      %43 = vsyncadd [#allocation4], %s42
      %s44 = sshll.u32 [#allocation5], 4
      %s45 = int_to_ptr.vmem [resolvable:$true] %s44
      %50 = dma.vmem_to_hbm [thread:$0]  %s45, 256, %s1, [#allocation4], 128, 128, 8
    $region13: #{tpu_custom_call.1} parent=1 // pred_fallthru
      _
    // Predicated region
    $region14: #{tpu_custom_call.1} parent=1 // pred_check
      _
    $region15: #{tpu_custom_call.1} parent=1 // pred_check_branch
      %52 = sbr.rel (0) target = $region17
    $region16: #{tpu_custom_call.1} parent=1 // pred_region
      %53 = dma.done [#allocation4], 256
    $region17: #{tpu_custom_call.1} parent=1 // pred_fallthru
      _
    %54 = vsyncpa [#allocation3], 1
    %55 = vsyncpa [#allocation4], 1

</llo_original>
